<compile_context>
chip_gen: v5e
topology: v5e:2x2
jax: 0.10.0
libtpu: 0.0.40
codegen_flags: <defaults>
</compile_context>

<pallas_src>
import math
import functools

import jax
import jax.numpy as jnp
from jax import lax
from jax.experimental import pallas as pl
from jax.experimental.pallas import tpu as pltpu

NEG_INF = -1e30


# ----------------------------------------------------------------------------------
# helpers
# ----------------------------------------------------------------------------------
def _pick_tile(dim, target, align):
    """Largest tile <= target that divides `dim` and is a multiple of `align`
    (falls back to the full dim, which always satisfies the TPU (8,128) layout rule).
    Activations stay f32 in HBM (cast to bf16 in-kernel), so sublane align=8 is valid."""
    if dim <= target:
        return dim
    t = (target // align) * align
    while t >= align:
        if dim % t == 0:
            return t
        t -= align
    return dim


# ----------------------------------------------------------------------------------
# Tiled linear:  y = x @ w_t + b      (w_t is the nn.Linear weight pre-transposed)
# bf16 MXU operands, f32 accumulation.
# ----------------------------------------------------------------------------------
def _linear_kernel(x_ref, w_ref, b_ref, o_ref, acc_ref):
    @pl.when(pl.program_id(2) == 0)
    def _init():
        acc_ref[...] = jnp.zeros_like(acc_ref)

    acc_ref[...] += jnp.dot(x_ref[...].astype(jnp.bfloat16),
                            w_ref[...].astype(jnp.bfloat16),
                            preferred_element_type=jnp.float32)

    @pl.when(pl.program_id(2) == pl.num_programs(2) - 1)
    def _finalize():
        o_ref[...] = (acc_ref[...] + b_ref[...]).astype(o_ref.dtype)


def linear(x, w_t, b, *, tm=512, tn=512, tk=512):
    """x: (M, Din), w_t: (Din, Dout), b: (Dout,) -> (M, Dout).
    512-tiles use ~7 MiB of VMEM (f32, double-buffered) -> fits the scoped default
    on v5e/v6e/v7x; raise vmem_limit_bytes before pushing tk toward 1024."""
    M, Din = x.shape
    Dout = w_t.shape[1]
    tm = _pick_tile(M, tm, 8)
    tn = _pick_tile(Dout, tn, 128)
    tk = _pick_tile(Din, tk, 128)
    grid = (M // tm, Dout // tn, Din // tk)
    return pl.pallas_call(
        _linear_kernel,
        out_shape=jax.ShapeDtypeStruct((M, Dout), x.dtype),
        grid=grid,
        in_specs=[
            pl.BlockSpec((tm, tk), lambda i, j, k: (i, k)),
            pl.BlockSpec((tk, tn), lambda i, j, k: (k, j)),
            pl.BlockSpec((1, tn), lambda i, j, k: (0, j)),
        ],
        out_specs=pl.BlockSpec((tm, tn), lambda i, j, k: (i, j)),
        scratch_shapes=[pltpu.VMEM((tm, tn), jnp.float32)],
        compiler_params=pltpu.CompilerParams(
            dimension_semantics=("parallel", "parallel", "arbitrary")),
    )(x, w_t, b.reshape(1, Dout))


# ----------------------------------------------------------------------------------
# Flash attention (causal), lane-dense (B, S, H*dk) activations
# ----------------------------------------------------------------------------------
def _flash_kernel(q_ref, k_ref, v_ref, o_ref, m_sc, l_sc, acc_sc, *, tq, tkv, H, dk):
    qi = pl.program_id(1)
    ki = pl.program_id(2)

    @pl.when(ki == 0)
    def _init():
        m_sc[...] = jnp.full_like(m_sc, NEG_INF)
        l_sc[...] = jnp.zeros_like(l_sc)
        acc_sc[...] = jnp.zeros_like(acc_sc)

    # Skip kv tiles lying entirely above the causal diagonal for this q tile.
    @pl.when(ki * tkv <= qi * tq + (tq - 1))
    def _body():
        # Lane-dense (t, H*dk) tiles; one cast to bf16 for the MXU (scale already
        # folded into W_q, so no per-tile VPU multiply).
        q2 = q_ref[0].astype(jnp.bfloat16)          # (tq,  H*dk)
        k2 = k_ref[0].astype(jnp.bfloat16)          # (tkv, H*dk)
        v2 = v_ref[0].astype(jnp.bfloat16)          # (tkv, H*dk)

        def update(mask):
            # Per-head MXU contractions on lane-slices of the dense tiles (dk=64
            # contraction underfills the MXU whether or not the heads are batched;
            # Mosaic unrolls batched dot_general over heads, so this is equivalent).
            for h in range(H):
                sl = slice(h * dk, (h + 1) * dk)
                qh, kh, vh = q2[:, sl], k2[:, sl], v2[:, sl]
                # q . k^T contracting the trailing dk dims directly (no transpose).
                s = lax.dot_general(qh, kh, (((1,), (1,)), ((), ())),
                                    preferred_element_type=jnp.float32)  # (tq, tkv)
                if mask is not None:
                    s = jnp.where(mask, s, NEG_INF)
                m_prev = m_sc[:, h:h + 1]                                # (tq, 1)
                m_new = jnp.maximum(m_prev, jnp.max(s, axis=-1, keepdims=True))
                alpha = jnp.exp(m_prev - m_new)
                p = jnp.exp(s - m_new)
                l_sc[:, h:h + 1] = alpha * l_sc[:, h:h + 1] + \
                    jnp.sum(p, axis=-1, keepdims=True)
                pv = jnp.dot(p.astype(jnp.bfloat16), vh,
                             preferred_element_type=jnp.float32)         # (tq, dk)
                acc_sc[:, sl] = alpha * acc_sc[:, sl] + pv
                m_sc[:, h:h + 1] = m_new

        # Tiles fully below the diagonal need no mask; only diagonal tiles do.
        needs_mask = (ki + 1) * tkv - 1 > qi * tq

        @pl.when(needs_mask)
        def _masked():
            row = qi * tq + lax.broadcasted_iota(jnp.int32, (tq, tkv), 0)
            col = ki * tkv + lax.broadcasted_iota(jnp.int32, (tq, tkv), 1)
            update(row >= col)          # mask built once, shared across heads

        @pl.when(jnp.logical_not(needs_mask))
        def _unmasked():
            update(None)                # no iota / compare / select

    @pl.when(ki == pl.num_programs(2) - 1)
    def _finalize():
        outs = []
        for h in range(H):
            l = l_sc[:, h:h + 1]
            inv = pl.reciprocal(l, approx=True)
            inv = inv * (2.0 - l * inv)             # one Newton step -> f32-accurate
            outs.append(acc_sc[:, h * dk:(h + 1) * dk] * inv)
        # Single lane-dense (tq, H*dk) store -- no masked per-head vst.
        o_ref[0] = jnp.concatenate(outs, axis=-1).astype(o_ref.dtype)


def flash_attention(q, k, v, *, num_heads, d_model, q_col=0, k_col=0, v_col=0,
                    block_q=128, block_kv=256):
    """q/k/v: (B, S, C*d_model) with the *_col block index selecting the d_model
    slab (C=1 for separate projections, C=3 for the packed QKV buffer).
    Causal mask applied in-kernel.  Returns (B, Sq, d_model)."""
    B, Sq = q.shape[0], q.shape[1]
    Skv = k.shape[1]
    dk = d_model // num_heads
    tq = _pick_tile(Sq, block_q, 8)
    tkv = _pick_tile(Skv, block_kv, 8)
    kernel = functools.partial(_flash_kernel, tq=tq, tkv=tkv, H=num_heads, dk=dk)

    def q_spec(col):
        return pl.BlockSpec((1, tq, d_model), lambda b, qi, ki: (b, qi, col))

    def kv_spec(col):
        return pl.BlockSpec((1, tkv, d_model), lambda b, qi, ki: (b, ki, col))

    return pl.pallas_call(
        kernel,
        out_shape=jax.ShapeDtypeStruct((B, Sq, d_model), q.dtype),
        grid=(B, Sq // tq, Skv // tkv),
        in_specs=[q_spec(q_col), kv_spec(k_col), kv_spec(v_col)],
        out_specs=pl.BlockSpec((1, tq, d_model), lambda b, qi, ki: (b, qi, 0)),
        scratch_shapes=[
            pltpu.VMEM((tq, num_heads), jnp.float32),   # running max m (per head)
            pltpu.VMEM((tq, num_heads), jnp.float32),   # running sum l (per head)
            pltpu.VMEM((tq, d_model), jnp.float32),     # lane-dense un-normalized acc
        ],
        compiler_params=pltpu.CompilerParams(
            dimension_semantics=("parallel", "parallel", "arbitrary")),
    )(q, k, v)


# ----------------------------------------------------------------------------------
# Parameters
# ----------------------------------------------------------------------------------
def init_mha_params(key, d_model):
    ks = jax.random.split(key, 8)
    bound = 1.0 / math.sqrt(d_model)

    def lin(kw, kb):
        w = jax.random.uniform(kw, (d_model, d_model), jnp.float32, -bound, bound)
        b = jax.random.uniform(kb, (d_model,), jnp.float32, -bound, bound)
        return w, b  # nn.Linear layout: (out, in)

    return dict(W_q=lin(ks[0], ks[1]), W_k=lin(ks[2], ks[3]),
                W_v=lin(ks[4], ks[5]), W_o=lin(ks[6], ks[7]))


def prepare_mha_params(params, num_heads):
    """One-time parameter transform: fold 1/sqrt(d_k) into W_q/b_q, pre-transpose all
    weights, and pre-concatenate the fused [Wq|Wk|Wv] projection (hoisted out of the
    forward pass)."""
    wq, bq = params["W_q"]
    wk, bk = params["W_k"]
    wv, bv = params["W_v"]
    wo, bo = params["W_o"]
    d_model = wq.shape[0]
    scale = 1.0 / math.sqrt(d_model // num_heads)
    wq_t = (wq * scale).T
    bq_s = bq * scale
    return dict(
        wq_t=wq_t, bq=bq_s, wk_t=wk.T, bk=bk, wv_t=wv.T, bv=bv,
        w_qkv_t=jnp.concatenate([wq_t, wk.T, wv.T], axis=1),   # (D, 3D)
        b_qkv=jnp.concatenate([bq_s, bk, bv]),                 # (3D,)
        wo_t=wo.T, bo=bo,
        num_heads=num_heads, d_model=d_model)


# ----------------------------------------------------------------------------------
# Full module forward
# ----------------------------------------------------------------------------------
def mha_forward(prep, Q, K, V, *, block_q=128, block_kv=256):
    # TODO(synk): general flex_attention score_mod / arbitrary BlockMask is not
    # translatable generically; the causal block mask is implemented in-kernel.
    B, S, D = Q.shape
    H = prep["num_heads"]

    if Q is K and K is V:
        # Self-attention: one fused GEMM x @ [Wq|Wk|Wv]; the packed (B, S, 3D)
        # result feeds flash_attention directly (BlockSpecs pick the q/k/v slabs),
        # so there is no jnp.split / extra HBM round trip.
        # (Identity gating is perf-only: equal-valued distinct arrays take the
        #  3-GEMM path below with identical numerics.)
        qkv = linear(Q.reshape(B * S, D), prep["w_qkv_t"], prep["b_qkv"])
        qkv = qkv.reshape(B, S, 3 * D)                        # free reshape
        attn = flash_attention(qkv, qkv, qkv, num_heads=H, d_model=D,
                               q_col=0, k_col=1, v_col=2,
                               block_q=block_q, block_kv=block_kv)
    else:
        Skv = K.shape[1]
        q = linear(Q.reshape(B * S, D), prep["wq_t"], prep["bq"]).reshape(B, S, D)
        k = linear(K.reshape(B * Skv, D), prep["wk_t"], prep["bk"]).reshape(B, Skv, D)
        v = linear(V.reshape(B * Skv, D), prep["wv_t"], prep["bv"]).reshape(B, Skv, D)
        attn = flash_attention(q, k, v, num_heads=H, d_model=D,
                               block_q=block_q, block_kv=block_kv)

    # combine_heads is a free reshape in (B, S, H*dk) layout.
    # TODO(synk): on v7x, fusing W_o into the attention finalize (or prefetching W_o
    # cross-call) would remove one more activation HBM round trip.
    return linear(attn.reshape(B * S, D), prep["wo_t"], prep["bo"]).reshape(B, S, D)


# ----------------------------------------------------------------------------------
# Pure-JAX reference (causal flex_attention semantics, f32 HIGHEST)
# ----------------------------------------------------------------------------------
def mha_reference(params, Q, K, V, num_heads):
    B, Sq, D = Q.shape
    Skv = K.shape[1]
    d_k = D // num_heads
    hp = lax.Precision.HIGHEST

    def lin(x, wb):
        w, b = wb
        return jnp.einsum("bsd,od->bso", x, w, precision=hp) + b

    def split(x):
        return x.reshape(B, -1, num_heads, d_k).transpose(0, 2, 1, 3)

    q = split(lin(Q, params["W_q"]))
    k = split(lin(K, params["W_k"]))
    v = split(lin(V, params["W_v"]))
    s = jnp.einsum("bhqd,bhkd->bhqk", q, k, precision=hp) / math.sqrt(d_k)
    causal = jnp.tril(jnp.ones((Sq, Skv), dtype=bool))
    s = jnp.where(causal[None, None], s, -1e30)
    p = jax.nn.softmax(s, axis=-1)
    o = jnp.einsum("bhqk,bhkd->bhqd", p, v, precision=hp)
    o = o.transpose(0, 2, 1, 3).reshape(B, Sq, D)
    return lin(o, params["W_o"])


if __name__ == "__main__":
    B, S, d_model, num_heads = 2, 16, 256, 4

    key = jax.random.PRNGKey(0)
    kp, kq, kk, kv, kl1, kl2, kl3 = jax.random.split(key, 7)
    params = init_mha_params(kp, d_model)
    prep = prepare_mha_params(params, num_heads)

    Q = jax.random.normal(kq, (B, S, d_model), jnp.float32)
    K = jax.random.normal(kk, (B, S, d_model), jnp.float32)
    V = jax.random.normal(kv, (B, S, d_model), jnp.float32)

    # bf16 MXU inputs / f32 accumulation vs. an f32-HIGHEST reference => looser tol.
    TOL = dict(atol=4e-2, rtol=4e-2)

    # Cross-attention path; small q/kv blocks exercise multi-tile online softmax,
    # the causal-skip path, masked diagonal tiles and the unmasked fast path.
    out = jax.block_until_ready(mha_forward(prep, Q, K, V, block_q=8, block_kv=8))
    ref = mha_reference(params, Q, K, V, num_heads)
    assert out.shape == (B, S, d_model)
    assert jnp.allclose(out, ref, **TOL), "cross-attention mismatch"

    # Self-attention exercises the fused [Wq|Wk|Wv] projection + packed QKV slabs.
    out_sa = jax.block_until_ready(mha_forward(prep, Q, Q, Q, block_q=8, block_kv=8))
    ref_sa = mha_reference(params, Q, Q, Q, num_heads)
    assert jnp.allclose(out_sa, ref_sa, **TOL), "self-attention mismatch"

    # Default block sizes (single kv tile: init/body/finalize in one grid step).
    out_d = jax.block_until_ready(mha_forward(prep, Q, Q, Q))
    assert jnp.allclose(out_d, ref_sa, **TOL), "default-block self-attention mismatch"

    # Standalone check of the tiled linear with a multi-step K reduction.
    xl = jax.random.normal(kl1, (64, 256), jnp.float32)
    wl = jax.random.normal(kl2, (256, 128), jnp.float32) * 0.05
    bl = jax.random.normal(kl3, (128,), jnp.float32)
    yl = jax.block_until_ready(linear(xl, wl, bl, tm=32, tn=128, tk=128))
    yl_ref = jnp.einsum("mk,kn->mn", xl, wl, precision=lax.Precision.HIGHEST) + bl
    assert jnp.allclose(yl, yl_ref, atol=4e-2, rtol=4e-2), "tiled linear mismatch"

    print("KERNEL_OK")
</pallas_src>

<mosaic_0001>
module attributes {stable_mosaic.version = 11 : i64} {
  func.func @_linear_kernel(%arg0: i32, %arg1: i32, %arg2: i32, %arg3: memref<32x256xf32, #tpu.memory_space<vmem>>, %arg4: memref<256x256xf32, #tpu.memory_space<vmem>>, %arg5: memref<1x256xf32, #tpu.memory_space<vmem>>, %arg6: memref<32x256xf32, #tpu.memory_space<vmem>>, %arg7: memref<32x256xf32, #tpu.memory_space<vmem>>) attributes {dimension_semantics = [#tpu.dimension_semantics<parallel>, #tpu.dimension_semantics<parallel>, #tpu.dimension_semantics<arbitrary>], iteration_bounds = array<i64: 1, 1, 1>, scalar_prefetch = 0 : i64, scratch_operands = 1 : i64, tpu.core_type = #tpu.core_type<tc>, window_params = [{transform_indices = @transform_0, window_bounds = array<i64: 32, 256>}, {transform_indices = @transform_1, window_bounds = array<i64: 256, 256>}, {transform_indices = @transform_2, window_bounds = array<i64: 1, 256>}, {transform_indices = @transform_3, window_bounds = array<i64: 32, 256>}]} {
    %c0_i32 = arith.constant 0 : i32
    %0 = arith.cmpi eq, %arg2, %c0_i32 : i32
    %1 = arith.extui %0 : i1 to i32
    %c0_i32_0 = arith.constant 0 : i32
    %2 = arith.cmpi ne, %1, %c0_i32_0 : i32
    scf.if %2 {
      %cst_10 = arith.constant 0.000000e+00 : f32
      %14 = vector.broadcast %cst_10 : f32 to vector<32x256xf32>
      %c0_11 = arith.constant 0 : index
      %c0_12 = arith.constant 0 : index
      %15 = vector.load %arg7[%c0_11, %c0_12] : memref<32x256xf32, #tpu.memory_space<vmem>>, vector<32x256xf32>
      tpu.vector_store %arg7[%c0_11, %c0_12], %14 {strides = array<i32>} : memref<32x256xf32, #tpu.memory_space<vmem>>, vector<32x256xf32>,
    } else {
    }
    %c0 = arith.constant 0 : index
    %c0_1 = arith.constant 0 : index
    %3 = vector.load %arg7[%c0, %c0_1] : memref<32x256xf32, #tpu.memory_space<vmem>>, vector<32x256xf32>
    %c0_2 = arith.constant 0 : index
    %c0_3 = arith.constant 0 : index
    %4 = vector.load %arg3[%c0_2, %c0_3] : memref<32x256xf32, #tpu.memory_space<vmem>>, vector<32x256xf32>
    %5 = arith.truncf %4 : vector<32x256xf32> to vector<32x256xbf16>
    %c0_4 = arith.constant 0 : index
    %c0_5 = arith.constant 0 : index
    %6 = vector.load %arg4[%c0_4, %c0_5] : memref<256x256xf32, #tpu.memory_space<vmem>>, vector<256x256xf32>
    %7 = arith.truncf %6 : vector<256x256xf32> to vector<256x256xbf16>
    %cst = arith.constant dense<0.000000e+00> : vector<32x256xf32>
    %8 = tpu.matmul %5, %7, %cst {dimension_numbers = #tpu.dot_dimension_numbers<[1], [0], [0], [1], [0, 0, 1, 1], [], []>} : vector<32x256xbf16>, vector<256x256xbf16>, vector<32x256xf32> -> vector<32x256xf32>
    %9 = arith.addf %3, %8 : vector<32x256xf32>
    %c0_6 = arith.constant 0 : index
    %c0_7 = arith.constant 0 : index
    %10 = vector.load %arg7[%c0_6, %c0_7] : memref<32x256xf32, #tpu.memory_space<vmem>>, vector<32x256xf32>
    tpu.vector_store %arg7[%c0_6, %c0_7], %9 {strides = array<i32>} : memref<32x256xf32, #tpu.memory_space<vmem>>, vector<32x256xf32>,
    %c0_i32_8 = arith.constant 0 : i32
    %11 = arith.cmpi eq, %arg2, %c0_i32_8 : i32
    %12 = arith.extui %11 : i1 to i32
    %c0_i32_9 = arith.constant 0 : i32
    %13 = arith.cmpi ne, %12, %c0_i32_9 : i32
    scf.if %13 {
      %c0_10 = arith.constant 0 : index
      %c0_11 = arith.constant 0 : index
      %14 = vector.load %arg7[%c0_10, %c0_11] : memref<32x256xf32, #tpu.memory_space<vmem>>, vector<32x256xf32>
      %c0_12 = arith.constant 0 : index
      %c0_13 = arith.constant 0 : index
      %15 = vector.load %arg5[%c0_12, %c0_13] : memref<1x256xf32, #tpu.memory_space<vmem>>, vector<1x256xf32>
      %16 = vector.broadcast %15 : vector<1x256xf32> to vector<32x256xf32>
      %17 = arith.addf %14, %16 : vector<32x256xf32>
      %c0_14 = arith.constant 0 : index
      %c0_15 = arith.constant 0 : index
      %18 = vector.load %arg6[%c0_14, %c0_15] : memref<32x256xf32, #tpu.memory_space<vmem>>, vector<32x256xf32>
      tpu.vector_store %arg6[%c0_14, %c0_15], %17 {strides = array<i32>} : memref<32x256xf32, #tpu.memory_space<vmem>>, vector<32x256xf32>,
    } else {
    }
    return
  }
  func.func @transform_0(%arg0: i32, %arg1: i32, %arg2: i32) -> (i32, i32) {
    %c0_i32 = arith.constant 0 : i32
    return %arg0, %arg2 : i32, i32
  }
  func.func @transform_1(%arg0: i32, %arg1: i32, %arg2: i32) -> (i32, i32) {
    %c0_i32 = arith.constant 0 : i32
    return %arg2, %arg1 : i32, i32
  }
  func.func @transform_2(%arg0: i32, %arg1: i32, %arg2: i32) -> (i32, i32) {
    %c0_i32 = arith.constant 0 : i32
    %c0_i32_0 = arith.constant 0 : i32
    return %c0_i32, %arg1 : i32, i32
  }
  func.func @transform_3(%arg0: i32, %arg1: i32, %arg2: i32) -> (i32, i32) {
    %c0_i32 = arith.constant 0 : i32
    return %arg0, %arg1 : i32, i32
  }
}

</mosaic_0001>

<llo_original>
// kernel: tpu_custom_call.1
$region0: #{tpu_custom_call.1}
  #allocation0 [shape = 'u32[]', space=smem, size = 0x4, offset = 0x4, fixed_abs, tag = 'smem constant byte address 0x4 - core index']
  #allocation1 [shape = 'u32[72,128]{1,0:T(1,128)}', space=vmem, size = 0x9000, scoped, tag = 'internal scratch']
  #allocation2 [shape = 'f32[32,256]{1,0:T(8,128)}', space=vmem, size = 0x8000, scoped, tag = 'scratch operand']
  %s0 = inlined_call_operand.hbm [shape: f32[32,256], index: 0, kind: input, shape index: {}]
  %s1 = inlined_call_operand.hbm [shape: f32[256,256], index: 1, kind: input, shape index: {}]
  %s2 = inlined_call_operand.hbm [shape: f32[1,256], index: 2, kind: input, shape index: {}]
  %s3 = inlined_call_operand.hbm [shape: f32[32,256], index: 3, kind: output, shape index: {}]
  %s4 = sld [smem:[#allocation0]]
  $region42: #{tpu_custom_call.1} parent=0
    _
  %s6 = ssub.s32 1, %s4
  %s7 = scalar_select 0, %s6, %s4
  $region1: #{tpu_custom_call.1} parent=0
    #allocation3 [shape = 'u8[32768]{0}', space=vmem, size = 0x8000, scoped, tag = 'input window, operand 0, single buffered']
    #allocation4 [shape = 's32[1]{0}', space=sflag, size = 0x4, scoped, tag = 'scoped memory for tpu_custom_call.1']
    #allocation5 [shape = 's32[1]{0}', space=sflag, size = 0x4, scoped, tag = 'scoped memory for tpu_custom_call.1']
    #allocation6 [shape = 'u8[262144]{0}', space=vmem, size = 0x40000, scoped, tag = 'input window, operand 1, single buffered']
    #allocation7 [shape = 's32[1]{0}', space=sflag, size = 0x4, scoped, tag = 'scoped memory for tpu_custom_call.1']
    #allocation8 [shape = 'u8[1024]{0}', space=vmem, size = 0x400, scoped, tag = 'input window, operand 2, single buffered']
    #allocation9 [shape = 'u8[32768]{0}', space=vmem, size = 0x8000, scoped, tag = 'output window, operand 0, single buffered']
    %8 = vsyncpa [#allocation4], 0
    %9 = vsyncpa [#allocation7], 0
    %10 = vsyncpa [#allocation5], 0
    // Predicated region
    $region2: #{tpu_custom_call.1} parent=1 // pred_check
      _
    $region3: #{tpu_custom_call.1} parent=1 // pred_check_branch
      %12 = sbr.rel (0) target = $region5
    $region4: #{tpu_custom_call.1} parent=1 // pred_region
      %14 = vsyncadd [#allocation4], 0
      %s15 = sshll.u32 %s0, 4
      %s16 = int_to_ptr.hbm [resolvable:$true] %s15
      %s17 = sshll.u32 [#allocation3], 4
      %s18 = int_to_ptr.vmem [resolvable:$true] %s17
      %23 = dma.hbm_to_vmem [thread:$0]  %s16, 1024, %s18, [#allocation4], 256, 256, 16
    $region5: #{tpu_custom_call.1} parent=1 // pred_fallthru
      _
    // Predicated region
    $region6: #{tpu_custom_call.1} parent=1 // pred_check
      _
    $region7: #{tpu_custom_call.1} parent=1 // pred_check_branch
      %25 = sbr.rel (0) target = $region9
    $region8: #{tpu_custom_call.1} parent=1 // pred_region
      %27 = vsyncadd [#allocation7], 0
      %s28 = sshll.u32 %s1, 4
      %s29 = int_to_ptr.hbm [resolvable:$true] %s28
      %s30 = sshll.u32 [#allocation6], 4
      %s31 = int_to_ptr.vmem [resolvable:$true] %s30
      %36 = dma.hbm_to_vmem [thread:$0]  %s29, 8192, %s31, [#allocation7], 256, 256, 16
    $region9: #{tpu_custom_call.1} parent=1 // pred_fallthru
      _
    // Predicated region
    $region10: #{tpu_custom_call.1} parent=1 // pred_check
      _
    $region11: #{tpu_custom_call.1} parent=1 // pred_check_branch
      %38 = sbr.rel (0) target = $region13
    $region12: #{tpu_custom_call.1} parent=1 // pred_region
      %40 = vsyncadd [#allocation7], 0
      %s42 = sshll.u32 %s2, 4
      %s43 = int_to_ptr.hbm [resolvable:$true] %s42
      %s44 = sshll.u32 [#allocation8], 4
      %s45 = int_to_ptr.vmem [resolvable:$true] %s44
      %47 = dma.hbm_to_vmem [thread:$0]  %s43, 32, %s45, [#allocation7]
    $region13: #{tpu_custom_call.1} parent=1 // pred_fallthru
      _
    // Predicated region
    $region14: #{tpu_custom_call.1} parent=1 // pred_check
      _
    $region15: #{tpu_custom_call.1} parent=1 // pred_check_branch
      %49 = sbr.rel (0) target = $region17
    $region16: #{tpu_custom_call.1} parent=1 // pred_region
      %51 = dma.done [#allocation4], 1024
    $region17: #{tpu_custom_call.1} parent=1 // pred_fallthru
      _
    // Predicated region
    $region18: #{tpu_custom_call.1} parent=1 // pred_check
      _
    $region19: #{tpu_custom_call.1} parent=1 // pred_check_branch
      %53 = sbr.rel (0) target = $region21
    $region20: #{tpu_custom_call.1} parent=1 // pred_region
      %55 = dma.done [#allocation7], 8192
    $region21: #{tpu_custom_call.1} parent=1 // pred_fallthru
      _
    // Predicated region
    $region22: #{tpu_custom_call.1} parent=1 // pred_check
      _
    $region23: #{tpu_custom_call.1} parent=1 // pred_check_branch
      %57 = sbr.rel (0) target = $region25
    $region24: #{tpu_custom_call.1} parent=1 // pred_region
      %59 = dma.done [#allocation7], 32
    $region25: #{tpu_custom_call.1} parent=1 // pred_fallthru
      _
    %p60 = scmp.eq.s32.totalorder 0, 0
    // Predicated region
    $region26: #{tpu_custom_call.1} parent=1 // pred_check
      %p61 = pneg %p60
    $region27: #{tpu_custom_call.1} parent=1 // pred_check_branch
      %63 = sbr.rel (%p61) target = $region29
    $region28: #{tpu_custom_call.1} parent=1 // pred_region
      %64 = vst [vmem:[#allocation2] sm:$0xff] 0.0
      %65 = vst [vmem:[#allocation2 + $0x8] sm:$0xff] 0.0
      %66 = vst [vmem:[#allocation2 + $0x10] sm:$0xff] 0.0
      %67 = vst [vmem:[#allocation2 + $0x18] sm:$0xff] 0.0
      %68 = vst [vmem:[#allocation2 + $0x20] sm:$0xff] 0.0
      %69 = vst [vmem:[#allocation2 + $0x28] sm:$0xff] 0.0
      %70 = vst [vmem:[#allocation2 + $0x30] sm:$0xff] 0.0
      %71 = vst [vmem:[#allocation2 + $0x38] sm:$0xff] 0.0
    $region29: #{tpu_custom_call.1} parent=1 // pred_fallthru
      _
    %v72 = vld [vmem:[#allocation2] sm:$0xff]
    %v73 = vld [vmem:[#allocation2 + $0x8] sm:$0xff]
    %v74 = vld [vmem:[#allocation2 + $0x10] sm:$0xff]
    %v75 = vld [vmem:[#allocation2 + $0x18] sm:$0xff]
    %v76 = vld [vmem:[#allocation2 + $0x20] sm:$0xff]
    %v77 = vld [vmem:[#allocation2 + $0x28] sm:$0xff]
    %v78 = vld [vmem:[#allocation2 + $0x30] sm:$0xff]
    %v79 = vld [vmem:[#allocation2 + $0x38] sm:$0xff]
    %v80 = vld [vmem:[#allocation3] sm:$0xff]
    %v81 = vld [vmem:[#allocation3 + $0x8] sm:$0xff]
    %v82 = vld [vmem:[#allocation3 + $0x10] sm:$0xff]
    %v83 = vld [vmem:[#allocation3 + $0x18] sm:$0xff]
    %v84 = vld [vmem:[#allocation3 + $0x20] sm:$0xff]
    %v85 = vld [vmem:[#allocation3 + $0x28] sm:$0xff]
    %v86 = vld [vmem:[#allocation3 + $0x30] sm:$0xff]
    %v87 = vld [vmem:[#allocation3 + $0x38] sm:$0xff]
    %v88 = vpack.c.bf16 %v82, %v80
    %v89 = vpack.c.bf16 %v83, %v81
    %v90 = vpack.c.bf16 %v86, %v84
    %v91 = vpack.c.bf16 %v87, %v85
    %v92 = vld [vmem:[#allocation6] sm:$0xff]
    %v93 = vld [vmem:[#allocation6 + $0x8] sm:$0xff]
    %v94 = vld [vmem:[#allocation6 + $0x10] sm:$0xff]
    %v95 = vld [vmem:[#allocation6 + $0x18] sm:$0xff]
    %v96 = vld [vmem:[#allocation6 + $0x20] sm:$0xff]
    %v97 = vld [vmem:[#allocation6 + $0x28] sm:$0xff]
    %v98 = vld [vmem:[#allocation6 + $0x30] sm:$0xff]
    %v99 = vld [vmem:[#allocation6 + $0x38] sm:$0xff]
    %v100 = vld [vmem:[#allocation6 + $0x40] sm:$0xff]
    %v101 = vld [vmem:[#allocation6 + $0x48] sm:$0xff]
    %v102 = vld [vmem:[#allocation6 + $0x50] sm:$0xff]
    %v103 = vld [vmem:[#allocation6 + $0x58] sm:$0xff]
    %v104 = vld [vmem:[#allocation6 + $0x60] sm:$0xff]
    %v105 = vld [vmem:[#allocation6 + $0x68] sm:$0xff]
    %v106 = vld [vmem:[#allocation6 + $0x70] sm:$0xff]
    %v107 = vld [vmem:[#allocation6 + $0x78] sm:$0xff]
    %v108 = vld [vmem:[#allocation6 + $0x80] sm:$0xff]
    %v109 = vld [vmem:[#allocation6 + $0x88] sm:$0xff]
    %v110 = vld [vmem:[#allocation6 + $0x90] sm:$0xff]
    %v111 = vld [vmem:[#allocation6 + $0x98] sm:$0xff]
    %v112 = vld [vmem:[#allocation6 + $0xa0] sm:$0xff]
    %v113 = vld [vmem:[#allocation6 + $0xa8] sm:$0xff]
    %v114 = vld [vmem:[#allocation6 + $0xb0] sm:$0xff]
    %v115 = vld [vmem:[#allocation6 + $0xb8] sm:$0xff]
    %v116 = vld [vmem:[#allocation6 + $0xc0] sm:$0xff]
    %v117 = vld [vmem:[#allocation6 + $0xc8] sm:$0xff]
    %v118 = vld [vmem:[#allocation6 + $0xd0] sm:$0xff]
    %v119 = vld [vmem:[#allocation6 + $0xd8] sm:$0xff]
    %v120 = vld [vmem:[#allocation6 + $0xe0] sm:$0xff]
    %v121 = vld [vmem:[#allocation6 + $0xe8] sm:$0xff]
    %v122 = vld [vmem:[#allocation6 + $0xf0] sm:$0xff]
    %v123 = vld [vmem:[#allocation6 + $0xf8] sm:$0xff]
    %v124 = vld [vmem:[#allocation6 + $0x100] sm:$0xff]
    %v125 = vld [vmem:[#allocation6 + $0x108] sm:$0xff]
    %v126 = vld [vmem:[#allocation6 + $0x110] sm:$0xff]
    %v127 = vld [vmem:[#allocation6 + $0x118] sm:$0xff]
    %v128 = vld [vmem:[#allocation6 + $0x120] sm:$0xff]
    %v129 = vld [vmem:[#allocation6 + $0x128] sm:$0xff]
    %v130 = vld [vmem:[#allocation6 + $0x130] sm:$0xff]
    %v131 = vld [vmem:[#allocation6 + $0x138] sm:$0xff]
    %v132 = vld [vmem:[#allocation6 + $0x140] sm:$0xff]
    %v133 = vld [vmem:[#allocation6 + $0x148] sm:$0xff]
    %v134 = vld [vmem:[#allocation6 + $0x150] sm:$0xff]
    %v135 = vld [vmem:[#allocation6 + $0x158] sm:$0xff]
    %v136 = vld [vmem:[#allocation6 + $0x160] sm:$0xff]
    %v137 = vld [vmem:[#allocation6 + $0x168] sm:$0xff]
    %v138 = vld [vmem:[#allocation6 + $0x170] sm:$0xff]
    %v139 = vld [vmem:[#allocation6 + $0x178] sm:$0xff]
    %v140 = vld [vmem:[#allocation6 + $0x180] sm:$0xff]
    %v141 = vld [vmem:[#allocation6 + $0x188] sm:$0xff]
    %v142 = vld [vmem:[#allocation6 + $0x190] sm:$0xff]
    %v143 = vld [vmem:[#allocation6 + $0x198] sm:$0xff]
    %v144 = vld [vmem:[#allocation6 + $0x1a0] sm:$0xff]
    %v145 = vld [vmem:[#allocation6 + $0x1a8] sm:$0xff]
    %v146 = vld [vmem:[#allocation6 + $0x1b0] sm:$0xff]
    %v147 = vld [vmem:[#allocation6 + $0x1b8] sm:$0xff]
    %v148 = vld [vmem:[#allocation6 + $0x1c0] sm:$0xff]
    %v149 = vld [vmem:[#allocation6 + $0x1c8] sm:$0xff]
    %v150 = vld [vmem:[#allocation6 + $0x1d0] sm:$0xff]
    %v151 = vld [vmem:[#allocation6 + $0x1d8] sm:$0xff]
    %v152 = vld [vmem:[#allocation6 + $0x1e0] sm:$0xff]
    %v153 = vld [vmem:[#allocation6 + $0x1e8] sm:$0xff]
    %v154 = vld [vmem:[#allocation6 + $0x1f0] sm:$0xff]
    %v155 = vld [vmem:[#allocation6 + $0x1f8] sm:$0xff]
    %v156 = vpack.c.bf16 %v94, %v92
    %v157 = vpack.c.bf16 %v95, %v93
    %v158 = vpack.c.bf16 %v98, %v96
    %v159 = vpack.c.bf16 %v99, %v97
    %v160 = vpack.c.bf16 %v102, %v100
    %v161 = vpack.c.bf16 %v103, %v101
    %v162 = vpack.c.bf16 %v106, %v104
    %v163 = vpack.c.bf16 %v107, %v105
    %v164 = vpack.c.bf16 %v110, %v108
    %v165 = vpack.c.bf16 %v111, %v109
    %v166 = vpack.c.bf16 %v114, %v112
    %v167 = vpack.c.bf16 %v115, %v113
    %v168 = vpack.c.bf16 %v118, %v116
    %v169 = vpack.c.bf16 %v119, %v117
    %v170 = vpack.c.bf16 %v122, %v120
    %v171 = vpack.c.bf16 %v123, %v121
    %v172 = vpack.c.bf16 %v126, %v124
    %v173 = vpack.c.bf16 %v127, %v125
    %v174 = vpack.c.bf16 %v130, %v128
    %v175 = vpack.c.bf16 %v131, %v129
    %v176 = vpack.c.bf16 %v134, %v132
    %v177 = vpack.c.bf16 %v135, %v133
    %v178 = vpack.c.bf16 %v138, %v136
    %v179 = vpack.c.bf16 %v139, %v137
    %v180 = vpack.c.bf16 %v142, %v140
    %v181 = vpack.c.bf16 %v143, %v141
    %v182 = vpack.c.bf16 %v146, %v144
    %v183 = vpack.c.bf16 %v147, %v145
    %v184 = vpack.c.bf16 %v150, %v148
    %v185 = vpack.c.bf16 %v151, %v149
    %v186 = vpack.c.bf16 %v154, %v152
    %v187 = vpack.c.bf16 %v155, %v153
    %188 = vmatpush.bf16.msra.mxu0 %v170
    %189 = vmatpush.bf16.msra.mxu0 %v168
    %190 = vmatpush.bf16.msra.mxu0 %v166
    %191 = vmatpush.bf16.msra.mxu0 %v164
    %192 = vmatpush.bf16.msra.mxu0 %v162
    %193 = vmatpush.bf16.msra.mxu0 %v160
    %194 = vmatpush.bf16.msra.mxu0 %v158
    %195 = vmatpush.bf16.msra.mxu0 %v156
    %196 = vmatmul.bf16.gmra.mxu0 %v88
    %v197 = vpop.f32.mrf.mxu0
    %v198 = vadd.f32 0.0, %v197
    %v199 = vpop.f32.mrf.mxu0
    %v200 = vadd.f32 0.0, %v199
    %201 = vmatmul.bf16.gmra.mxu0 %v90
    %v202 = vpop.f32.mrf.mxu0
    %v203 = vadd.f32 0.0, %v202
    %v204 = vpop.f32.mrf.mxu0
    %v205 = vadd.f32 0.0, %v204
    %206 = vdwg.mxu0
    %207 = vmatpush.bf16.msra.mxu0 %v186
    %208 = vmatpush.bf16.msra.mxu0 %v184
    %209 = vmatpush.bf16.msra.mxu0 %v182
    %210 = vmatpush.bf16.msra.mxu0 %v180
    %211 = vmatpush.bf16.msra.mxu0 %v178
    %212 = vmatpush.bf16.msra.mxu0 %v176
    %213 = vmatpush.bf16.msra.mxu0 %v174
    %214 = vmatpush.bf16.msra.mxu0 %v172
    %215 = vmatmul.bf16.gmra.mxu0 %v89
    %v216 = vpop.f32.mrf.mxu0
    %v217 = vadd.f32 %v198, %v216
    %v218 = vpop.f32.mrf.mxu0
    %v219 = vadd.f32 %v200, %v218
    %220 = vmatmul.bf16.gmra.mxu0 %v91
    %v221 = vpop.f32.mrf.mxu0
    %v222 = vadd.f32 %v203, %v221
    %v223 = vpop.f32.mrf.mxu0
    %v224 = vadd.f32 %v205, %v223
    %225 = vdwg.mxu0
    %226 = vmatpush.bf16.msra.mxu0 %v171
    %227 = vmatpush.bf16.msra.mxu0 %v169
    %228 = vmatpush.bf16.msra.mxu0 %v167
    %229 = vmatpush.bf16.msra.mxu0 %v165
    %230 = vmatpush.bf16.msra.mxu0 %v163
    %231 = vmatpush.bf16.msra.mxu0 %v161
    %232 = vmatpush.bf16.msra.mxu0 %v159
    %233 = vmatpush.bf16.msra.mxu0 %v157
    %234 = vmatmul.bf16.gmra.mxu0 %v88
    %v235 = vpop.f32.mrf.mxu0
    %v236 = vadd.f32 0.0, %v235
    %v237 = vpop.f32.mrf.mxu0
    %v238 = vadd.f32 0.0, %v237
    %239 = vmatmul.bf16.gmra.mxu0 %v90
    %v240 = vpop.f32.mrf.mxu0
    %v241 = vadd.f32 0.0, %v240
    %v242 = vpop.f32.mrf.mxu0
    %v243 = vadd.f32 0.0, %v242
    %244 = vdwg.mxu0
    %245 = vmatpush.bf16.msra.mxu0 %v187
    %246 = vmatpush.bf16.msra.mxu0 %v185
    %247 = vmatpush.bf16.msra.mxu0 %v183
    %248 = vmatpush.bf16.msra.mxu0 %v181
    %249 = vmatpush.bf16.msra.mxu0 %v179
    %250 = vmatpush.bf16.msra.mxu0 %v177
    %251 = vmatpush.bf16.msra.mxu0 %v175
    %252 = vmatpush.bf16.msra.mxu0 %v173
    %253 = vmatmul.bf16.gmra.mxu0 %v89
    %v254 = vpop.f32.mrf.mxu0
    %v255 = vadd.f32 %v236, %v254
    %v256 = vpop.f32.mrf.mxu0
    %v257 = vadd.f32 %v238, %v256
    %258 = vmatmul.bf16.gmra.mxu0 %v91
    %v259 = vpop.f32.mrf.mxu0
    %v260 = vadd.f32 %v241, %v259
    %v261 = vpop.f32.mrf.mxu0
    %v262 = vadd.f32 %v243, %v261
    %263 = vdwg.mxu0
    %v264 = vadd.f32 %v72, %v217
    %v265 = vadd.f32 %v73, %v255
    %v266 = vadd.f32 %v74, %v219
    %v267 = vadd.f32 %v75, %v257
    %v268 = vadd.f32 %v76, %v222
    %v269 = vadd.f32 %v77, %v260
    %v270 = vadd.f32 %v78, %v224
    %v271 = vadd.f32 %v79, %v262
    %272 = vst [vmem:[#allocation2] sm:$0xff] %v264
    %273 = vst [vmem:[#allocation2 + $0x8] sm:$0xff] %v265
    %274 = vst [vmem:[#allocation2 + $0x10] sm:$0xff] %v266
    %275 = vst [vmem:[#allocation2 + $0x18] sm:$0xff] %v267
    %276 = vst [vmem:[#allocation2 + $0x20] sm:$0xff] %v268
    %277 = vst [vmem:[#allocation2 + $0x28] sm:$0xff] %v269
    %278 = vst [vmem:[#allocation2 + $0x30] sm:$0xff] %v270
    %279 = vst [vmem:[#allocation2 + $0x38] sm:$0xff] %v271
    // Predicated region
    $region30: #{tpu_custom_call.1} parent=1 // pred_check
      %p280 = pneg %p60
    $region31: #{tpu_custom_call.1} parent=1 // pred_check_branch
      %282 = sbr.rel (%p280) target = $region33
    $region32: #{tpu_custom_call.1} parent=1 // pred_region
      %v283 = vld [vmem:[#allocation2] sm:$0xff]
      %v284 = vld [vmem:[#allocation2 + $0x8] sm:$0xff]
      %v285 = vld [vmem:[#allocation2 + $0x10] sm:$0xff]
      %v286 = vld [vmem:[#allocation2 + $0x18] sm:$0xff]
      %v287 = vld [vmem:[#allocation2 + $0x20] sm:$0xff]
      %v288 = vld [vmem:[#allocation2 + $0x28] sm:$0xff]
      %v289 = vld [vmem:[#allocation2 + $0x30] sm:$0xff]
      %v290 = vld [vmem:[#allocation2 + $0x38] sm:$0xff]
      %v291 = vld [vmem:[#allocation8] sm:$0x3]
      %v293 = vperm.slane %v291, 0
      %v294 = vperm.slane %v291, 1
      %v297 = vadd.f32 %v283, %v293
      %v298 = vadd.f32 %v284, %v294
      %v299 = vadd.f32 %v285, %v293
      %v300 = vadd.f32 %v286, %v294
      %v301 = vadd.f32 %v287, %v293
      %v302 = vadd.f32 %v288, %v294
      %v303 = vadd.f32 %v289, %v293
      %v304 = vadd.f32 %v290, %v294
      %305 = vst [vmem:[#allocation9] sm:$0xff] %v297
      %306 = vst [vmem:[#allocation9 + $0x8] sm:$0xff] %v298
      %307 = vst [vmem:[#allocation9 + $0x10] sm:$0xff] %v299
      %308 = vst [vmem:[#allocation9 + $0x18] sm:$0xff] %v300
      %309 = vst [vmem:[#allocation9 + $0x20] sm:$0xff] %v301
      %310 = vst [vmem:[#allocation9 + $0x28] sm:$0xff] %v302
      %311 = vst [vmem:[#allocation9 + $0x30] sm:$0xff] %v303
      %312 = vst [vmem:[#allocation9 + $0x38] sm:$0xff] %v304
    $region33: #{tpu_custom_call.1} parent=1 // pred_fallthru
      _
    // Predicated region
    $region34: #{tpu_custom_call.1} parent=1 // pred_check
      _
    $region35: #{tpu_custom_call.1} parent=1 // pred_check_branch
      %314 = sbr.rel (0) target = $region37
    $region36: #{tpu_custom_call.1} parent=1 // pred_region
      %316 = vsyncadd [#allocation5], 0
      %s317 = sshll.u32 [#allocation9], 4
      %s318 = int_to_ptr.vmem [resolvable:$true] %s317
      %s319 = sshll.u32 %s3, 4
      %s320 = int_to_ptr.hbm [resolvable:$true] %s319
      %325 = dma.vmem_to_hbm [thread:$0]  %s318, 1024, %s320, [#allocation5], 256, 256, 16
    $region37: #{tpu_custom_call.1} parent=1 // pred_fallthru
      _
    // Predicated region
    $region38: #{tpu_custom_call.1} parent=1 // pred_check
      _
    $region39: #{tpu_custom_call.1} parent=1 // pred_check_branch
      %327 = sbr.rel (0) target = $region41
    $region40: #{tpu_custom_call.1} parent=1 // pred_region
      %329 = dma.done [#allocation5], 1024
    $region41: #{tpu_custom_call.1} parent=1 // pred_fallthru
      _
    %330 = vsyncpa [#allocation4], 1
    %331 = vsyncpa [#allocation7], 1
    %332 = vsyncpa [#allocation5], 1

</llo_original>
